<compile_context>
chip_gen: v7x
topology: tpu7x:2x2x1
jax: 0.10.0
libtpu: 0.0.40
codegen_flags: <defaults>
</compile_context>

<pallas_src>
import functools
import math

import jax
import jax.numpy as jnp
from jax.experimental import pallas as pl
from jax.experimental.pallas import tpu as pltpu


def _round_up(x, m):
    return ((x + m - 1) // m) * m


# ----------------------------- Pallas kernel --------------------------------

def _stacked_dense_kernel(*refs, activations, compute_dtype):
    """Fused stack of Linear(+activation) layers on one (TB, D0) batch tile.

    refs = (x_ref, w0_ref, b0_ref, w1_ref, b1_ref, ..., o_ref)
      x_ref : (TB, D0_pad)            compute_dtype
      wi_ref: (Di_pad, Di+1_pad)      compute_dtype (pre-transposed: y = h @ W_t)
      bi_ref: (1, Di+1_pad)           float32
      o_ref : (TB, Dlast_pad)         output dtype
    """
    x_ref = refs[0]
    o_ref = refs[-1]
    n_layers = len(activations)

    h = x_ref[...].astype(compute_dtype)
    for li in range(n_layers):
        w_ref = refs[1 + 2 * li]
        b_ref = refs[2 + 2 * li]
        # MXU matmul in compute_dtype, f32 accumulation.
        acc = jnp.dot(h, w_ref[...].astype(compute_dtype),
                      preferred_element_type=jnp.float32)
        acc = acc + b_ref[...].astype(jnp.float32)     # (1, D_out) row broadcast

        act = activations[li]
        if act == "tanh":
            acc = jnp.tanh(acc)                        # EUP
        elif act == "relu":
            acc = jnp.maximum(acc, 0.0)                # VPU
        elif act == "sigmoid":
            # exp on EUP; approx reciprocal also rides the EUP slot.
            acc = pl.reciprocal(1.0 + jnp.exp(-acc), approx=True)
        elif act is not None:
            raise ValueError(f"unsupported activation: {act}")

        if li < n_layers - 1:
            h = acc.astype(compute_dtype)              # stays on-chip
        else:
            o_ref[...] = acc.astype(o_ref.dtype)


def _stacked_dense_fused(x_pad, w_list, b_list, activations, tb, compute_dtype,
                         out_dtype):
    """x_pad: (Bpad, D0_pad); w_list[i]: (Di_pad, Di+1_pad); b_list[i]: (1, Di+1_pad)."""
    Bpad, D0 = x_pad.shape
    Dlast = w_list[-1].shape[1]
    grid = (Bpad // tb,)

    in_specs = [pl.BlockSpec((tb, D0), lambda i: (i, 0))]
    inputs = [x_pad]
    for w, b in zip(w_list, b_list):
        # Full weight/bias blocks with constant index maps: DMA'd once, then
        # VMEM-resident across all batch tiles.
        in_specs.append(pl.BlockSpec(w.shape, lambda i: (0, 0)))
        in_specs.append(pl.BlockSpec(b.shape, lambda i: (0, 0)))
        inputs.append(w)
        inputs.append(b)

    kernel = functools.partial(
        _stacked_dense_kernel,
        activations=tuple(activations),
        compute_dtype=compute_dtype,
    )

    return pl.pallas_call(
        kernel,
        out_shape=jax.ShapeDtypeStruct((Bpad, Dlast), out_dtype),
        grid_spec=pltpu.PrefetchScalarGridSpec(
            num_scalar_prefetch=0,
            grid=grid,
            in_specs=in_specs,
            out_specs=pl.BlockSpec((tb, Dlast), lambda i: (i, 0)),
        ),
        compiler_params=pltpu.CompilerParams(
            dimension_semantics=("parallel",)),
    )(*inputs)


# ----------------------------- Module wrapper --------------------------------

class StackedDense:
    """JAX/Pallas equivalent of the PyTorch StackedDense module.

    params: list of (weight (D_out, D_in), bias (D_out,)) per layer (PyTorch
    convention, kept in f32 for reference checks).  activation_fns: list of
    None / "tanh" / "relu" / "sigmoid".
    """

    def __init__(self, in_dimension, units, activation_fns, key,
                 compute_dtype=jnp.bfloat16):
        assert len(units) == len(activation_fns)
        dims = [in_dimension] + list(units)
        self.activations = list(activation_fns)
        self.compute_dtype = compute_dtype

        # Deterministic synthetic init (glorot-ish normal W, zero b); the
        # original `initializer.*` helpers are external to the spec.
        self.params = []
        for i in range(1, len(dims)):
            key, wk, _ = jax.random.split(key, 3)
            fan_in, fan_out = dims[i - 1], dims[i]
            std = math.sqrt(2.0 / (fan_in + fan_out))
            w = jax.random.normal(wk, (fan_out, fan_in), jnp.float32) * std
            b = jnp.zeros((fan_out,), jnp.float32)
            self.params.append((w, b))

        # Hoisted out of the hot path: transpose + zero-pad feature dims to a
        # multiple of 128 lanes, pre-cast weights to the MXU compute dtype.
        self.dims = dims
        self.padded_dims = [_round_up(d, 128) for d in dims]
        self._w_t_pad = []
        self._b_pad = []
        for i, (w, b) in enumerate(self.params):
            din_p, dout_p = self.padded_dims[i], self.padded_dims[i + 1]
            w_t = jnp.transpose(w)                                  # (D_in, D_out)
            w_t_p = jnp.zeros((din_p, dout_p), jnp.float32)
            w_t_p = w_t_p.at[: w_t.shape[0], : w_t.shape[1]].set(w_t)
            b_p = jnp.zeros((1, dout_p), jnp.float32)
            b_p = b_p.at[0, : b.shape[0]].set(b)
            self._w_t_pad.append(w_t_p.astype(compute_dtype))
            self._b_pad.append(b_p)                                 # bias stays f32

    def __call__(self, x, *, batch_tile=128):
        # Applies over the last axis, supporting arbitrary leading dims
        # (same as torch.nn.Linear / nn.Sequential).
        lead_shape = x.shape[:-1]
        d_in = x.shape[-1]
        d_out = self.dims[-1]
        out_dtype = x.dtype

        h = x.reshape(-1, d_in)
        b_flat = h.shape[0]

        # Batch tile: multiple of 8 sublanes, capped at batch_tile.
        tb = _round_up(min(batch_tile, _round_up(b_flat, 8)), 8)
        b_pad = _round_up(b_flat, tb)
        d0_pad = self.padded_dims[0]

        # Zero-pad rows (batch) and lanes (features); cast once to compute dtype.
        x_pad = jnp.zeros((b_pad, d0_pad), self.compute_dtype)
        x_pad = x_pad.at[:b_flat, :d_in].set(h.astype(self.compute_dtype))

        out = _stacked_dense_fused(
            x_pad, self._w_t_pad, self._b_pad, self.activations,
            tb, self.compute_dtype, out_dtype)

        y = out[:b_flat, :d_out]
        return y.reshape(*lead_shape, d_out)


# ----------------------------------- main ------------------------------------

if __name__ == "__main__":
    key = jax.random.PRNGKey(0)
    key, xk, pk = jax.random.split(key, 3)

    # Small shapes consistent with the module: batch=2, seq=8, in_dimension=32,
    # units=(64, 32), activations=(tanh, None).
    B, S, D_in = 2, 8, 32
    units = (64, 32)
    activations = ("tanh", None)

    x = jax.random.normal(xk, (B, S, D_in), jnp.float32)

    model = StackedDense(D_in, units, activations, pk)
    # batch_tile=8 -> grid=(2,): exercises the batch-tiled "parallel" pipeline.
    y = model(x, batch_tile=8)
    y = jax.block_until_ready(y)

    # Reference check in plain JAX (f32 math; kernel uses bf16 MXU operands
    # with f32 accumulation, hence the loose tolerance).
    h = x.reshape(-1, D_in)
    for (w, b), act in zip(model.params, model.activations):
        h = h @ w.T + b
        if act == "tanh":
            h = jnp.tanh(h)
        elif act == "relu":
            h = jnp.maximum(h, 0.0)
        elif act == "sigmoid":
            h = jax.nn.sigmoid(h)
    ref = h.reshape(B, S, units[-1])

    assert y.shape == (B, S, units[-1]), y.shape
    assert jnp.allclose(y, ref, atol=5e-2, rtol=5e-2), "mismatch vs reference"

    print("KERNEL_OK")
</pallas_src>

<mosaic_0001>
module attributes {stable_mosaic.version = 11 : i64} {
  func.func @_stacked_dense_kernel(%arg0: i32, %arg1: memref<8x128xbf16, #tpu.memory_space<vmem>>, %arg2: memref<128x128xbf16, #tpu.memory_space<vmem>>, %arg3: memref<1x128xf32, #tpu.memory_space<vmem>>, %arg4: memref<128x128xbf16, #tpu.memory_space<vmem>>, %arg5: memref<1x128xf32, #tpu.memory_space<vmem>>, %arg6: memref<8x128xf32, #tpu.memory_space<vmem>>) attributes {dimension_semantics = [#tpu.dimension_semantics<parallel>], iteration_bounds = array<i64: 2>, scalar_prefetch = 0 : i64, scratch_operands = 0 : i64, tpu.core_type = #tpu.core_type<tc>, window_params = [{transform_indices = @transform_0, window_bounds = array<i64: 8, 128>}, {pipeline_mode = #tpu.pipeline_mode<synchronous>, transform_indices = @transform_1, window_bounds = array<i64: 128, 128>}, {pipeline_mode = #tpu.pipeline_mode<synchronous>, transform_indices = @transform_2, window_bounds = array<i64: 1, 128>}, {pipeline_mode = #tpu.pipeline_mode<synchronous>, transform_indices = @transform_3, window_bounds = array<i64: 128, 128>}, {pipeline_mode = #tpu.pipeline_mode<synchronous>, transform_indices = @transform_4, window_bounds = array<i64: 1, 128>}, {transform_indices = @transform_5, window_bounds = array<i64: 8, 128>}]} {
    %c0 = arith.constant 0 : index
    %c0_0 = arith.constant 0 : index
    %0 = vector.load %arg1[%c0, %c0_0] : memref<8x128xbf16, #tpu.memory_space<vmem>>, vector<8x128xbf16>
    %c0_1 = arith.constant 0 : index
    %c0_2 = arith.constant 0 : index
    %1 = vector.load %arg2[%c0_1, %c0_2] : memref<128x128xbf16, #tpu.memory_space<vmem>>, vector<128x128xbf16>
    %cst = arith.constant dense<0.000000e+00> : vector<8x128xf32>
    %2 = tpu.matmul %0, %1, %cst {dimension_numbers = #tpu.dot_dimension_numbers<[1], [0], [0], [1], [0, 0, 1, 1], [], []>} : vector<8x128xbf16>, vector<128x128xbf16>, vector<8x128xf32> -> vector<8x128xf32>
    %c0_3 = arith.constant 0 : index
    %c0_4 = arith.constant 0 : index
    %3 = vector.load %arg3[%c0_3, %c0_4] : memref<1x128xf32, #tpu.memory_space<vmem>>, vector<1x128xf32>
    %4 = vector.broadcast %3 : vector<1x128xf32> to vector<8x128xf32>
    %5 = arith.addf %2, %4 : vector<8x128xf32>
    %6 = math.tanh %5 : vector<8x128xf32>
    %7 = arith.truncf %6 : vector<8x128xf32> to vector<8x128xbf16>
    %c0_5 = arith.constant 0 : index
    %c0_6 = arith.constant 0 : index
    %8 = vector.load %arg4[%c0_5, %c0_6] : memref<128x128xbf16, #tpu.memory_space<vmem>>, vector<128x128xbf16>
    %cst_7 = arith.constant dense<0.000000e+00> : vector<8x128xf32>
    %9 = tpu.matmul %7, %8, %cst_7 {dimension_numbers = #tpu.dot_dimension_numbers<[1], [0], [0], [1], [0, 0, 1, 1], [], []>} : vector<8x128xbf16>, vector<128x128xbf16>, vector<8x128xf32> -> vector<8x128xf32>
    %c0_8 = arith.constant 0 : index
    %c0_9 = arith.constant 0 : index
    %10 = vector.load %arg5[%c0_8, %c0_9] : memref<1x128xf32, #tpu.memory_space<vmem>>, vector<1x128xf32>
    %11 = vector.broadcast %10 : vector<1x128xf32> to vector<8x128xf32>
    %12 = arith.addf %9, %11 : vector<8x128xf32>
    %c0_10 = arith.constant 0 : index
    %c0_11 = arith.constant 0 : index
    %13 = vector.load %arg6[%c0_10, %c0_11] : memref<8x128xf32, #tpu.memory_space<vmem>>, vector<8x128xf32>
    tpu.vector_store %arg6[%c0_10, %c0_11], %12 {strides = array<i32>} : memref<8x128xf32, #tpu.memory_space<vmem>>, vector<8x128xf32>,
    return
  }
  func.func @transform_0(%arg0: i32) -> (i32, i32) {
    %c0_i32 = arith.constant 0 : i32
    %c0_i32_0 = arith.constant 0 : i32
    return %arg0, %c0_i32 : i32, i32
  }
  func.func @transform_1(%arg0: i32) -> (i32, i32) {
    %c0_i32 = arith.constant 0 : i32
    %c0_i32_0 = arith.constant 0 : i32
    %c0_i32_1 = arith.constant 0 : i32
    return %c0_i32, %c0_i32_0 : i32, i32
  }
  func.func @transform_2(%arg0: i32) -> (i32, i32) {
    %c0_i32 = arith.constant 0 : i32
    %c0_i32_0 = arith.constant 0 : i32
    %c0_i32_1 = arith.constant 0 : i32
    return %c0_i32, %c0_i32_0 : i32, i32
  }
  func.func @transform_3(%arg0: i32) -> (i32, i32) {
    %c0_i32 = arith.constant 0 : i32
    %c0_i32_0 = arith.constant 0 : i32
    %c0_i32_1 = arith.constant 0 : i32
    return %c0_i32, %c0_i32_0 : i32, i32
  }
  func.func @transform_4(%arg0: i32) -> (i32, i32) {
    %c0_i32 = arith.constant 0 : i32
    %c0_i32_0 = arith.constant 0 : i32
    %c0_i32_1 = arith.constant 0 : i32
    return %c0_i32, %c0_i32_0 : i32, i32
  }
  func.func @transform_5(%arg0: i32) -> (i32, i32) {
    %c0_i32 = arith.constant 0 : i32
    %c0_i32_0 = arith.constant 0 : i32
    return %arg0, %c0_i32 : i32, i32
  }
}

</mosaic_0001>

<llo_original>
// kernel: tpu_custom_call.1
$region0: #{tpu_custom_call.1}
  #allocation0 [shape = 'u32[]', space=smem, size = 0x4, offset = 0x4, fixed_abs, tag = 'smem constant byte address 0x4 - core index']
  #allocation1 [shape = 'u32[144,128]{1,0:T(1,128)}', space=vmem, size = 0x12000, scoped, tag = 'internal scratch']
  %s0 = inlined_call_operand.hbm [shape: bf16[16,128], index: 0, kind: input, shape index: {}]
  %s1 = inlined_call_operand.hbm [shape: bf16[128,128], index: 1, kind: input, shape index: {}]
  %s2 = inlined_call_operand.vmem [shape: f32[1,128], index: 2, kind: input, shape index: {}]
  %s3 = inlined_call_operand.hbm [shape: bf16[128,128], index: 3, kind: input, shape index: {}]
  %s4 = inlined_call_operand.vmem [shape: f32[1,128], index: 4, kind: input, shape index: {}]
  %s5 = inlined_call_operand.hbm [shape: f32[16,128], index: 5, kind: output, shape index: {}]
  %s6 = sld [smem:[#allocation0]]
  $region65: #{tpu_custom_call.1} parent=0
    _
  %s8 = ssub.s32 1, %s6
  %s9 = scalar_select 0, %s8, %s6
  $region1: #{tpu_custom_call.1} parent=0
    #allocation2 [shape = 'u8[4096]{0}', space=vmem, size = 0x1000, scoped, tag = 'input window, operand 0']
    #allocation3 [shape = 's32[2]{0}', space=sflag, size = 0x8, scoped, tag = 'scoped memory for tpu_custom_call.1']
    #allocation4 [shape = 's32[2]{0}', space=sflag, size = 0x8, scoped, tag = 'scoped memory for tpu_custom_call.1']
    #allocation5 [shape = 'u8[32768]{0}', space=vmem, size = 0x8000, scoped, tag = 'input window, operand 1, single buffered']
    #allocation6 [shape = 's32[1]{0}', space=sflag, size = 0x4, scoped, tag = 'scoped memory for tpu_custom_call.1']
    #allocation7 [shape = 'u8[32768]{0}', space=vmem, size = 0x8000, scoped, tag = 'input window, operand 3, single buffered']
    #allocation8 [shape = 'u8[8192]{0}', space=vmem, size = 0x2000, scoped, tag = 'output window, operand 0']
    %10 = vsyncpa [#allocation3], 0
    %s11 = scalar_lea.sflag [#allocation3], 1
    %12 = vsyncpa %s11, 0
    %13 = vsyncpa [#allocation6], 0
    %14 = vsyncpa [#allocation4], 0
    %s15 = scalar_lea.sflag [#allocation4], 1
    %16 = vsyncpa %s15, 0
    loop: start=0, step=1, limit=4
    $region2: #{tpu_custom_call.1} parent=1 // loop_pre_header
      _
    $region3: #{tpu_custom_call.1} parent=1 // loop_header
      %s18 = sphi 0, %s22
      %p19 = scmp.ge.s32.totalorder %s18, 4
      %s28 = sphi 0, %s30
      %s31 = sphi 0, %s28
      %s32 = sphi 0, %s31
      %s48 = sphi 0, %s32
      %s52 = sphi 0, %s52
      %s54 = sphi 0, %s52
      %s55 = sphi 0, %s54
      %s69 = sphi 0, %s55
      %s73 = sphi 0, %s73
      %s75 = sphi 0, %s73
      %s76 = sphi 0, %s75
      %s90 = sphi 0, %s76
      %s94 = sphi 0, %s94
      %s96 = sphi 0, %s94
      %s97 = sphi 0, %s96
      %s111 = sphi 0, %s97
      %s115 = sphi 0, %s115
      %s117 = sphi 0, %s115
      %s118 = sphi 0, %s117
      %s132 = sphi 0, %s118
      %s138 = sphi 0, %s140
      %s141 = sphi 0, %s138
      %s142 = sphi 0, %s141
      %s158 = sphi 0, %s142
    $region4: #{tpu_custom_call.1} parent=1 // loop_header_branch
      %21 = sbr.rel (%p19) target = $region8
    $region5: #{tpu_custom_call.1} parent=1 // loop_body
      %s23 = ssub.s32 %s18, 1
      %s24 = ssub.s32 %s18, 2
      %s25 = sadd.s32 %s18, 1
      %s26 = ssub.s32 %s18, %s25
      %p27 = scmp.eq.s32.totalorder %s26, 0
      %s29 = sadd.s32 %s28, 1
      %s30 = scalar_select %p27, %s28, %s29
      %p33 = pneg %p27
      %p34 = scmp.eq.s32.totalorder %s18, 1
      %p35 = por %p33, %p34
      %p36 = scmp.ne.s32.totalorder %s28, %s31
      %p37 = scmp.eq.s32.totalorder %s18, 0
      %p38 = por %p36, %p37
      %p39 = scmp.ne.s32.totalorder %s28, %s31
      %p40 = scmp.eq.s32.totalorder %s23, 1
      %p41 = por %p39, %p40
      %p42 = scmp.ne.s32.totalorder %s31, %s32
      %p43 = scmp.eq.s32.totalorder %s23, 0
      %p44 = por %p42, %p43
      %p45 = scmp.ne.s32.totalorder %s31, %s32
      %p46 = scmp.eq.s32.totalorder %s24, 1
      %p47 = por %p45, %p46
      %p49 = scmp.ne.s32.totalorder %s32, %s48
      %p50 = scmp.eq.s32.totalorder %s24, 0
      %p51 = por %p49, %p50
      %s53 = sadd.s32 %s52, 1
      %p56 = scmp.eq.s32.totalorder %s18, 1
      %p57 = scmp.ne.s32.totalorder %s52, %s54
      %p58 = scmp.eq.s32.totalorder %s18, 0
      %p59 = por %p57, %p58
      %p60 = scmp.ne.s32.totalorder %s52, %s54
      %p61 = scmp.eq.s32.totalorder %s23, 1
      %p62 = por %p60, %p61
      %p63 = scmp.ne.s32.totalorder %s54, %s55
      %p64 = scmp.eq.s32.totalorder %s23, 0
      %p65 = por %p63, %p64
      %p66 = scmp.ne.s32.totalorder %s54, %s55
      %p67 = scmp.eq.s32.totalorder %s24, 1
      %p68 = por %p66, %p67
      %p70 = scmp.ne.s32.totalorder %s55, %s69
      %p71 = scmp.eq.s32.totalorder %s24, 0
      %p72 = por %p70, %p71
      %s74 = sadd.s32 %s73, 1
      %p77 = scmp.eq.s32.totalorder %s18, 1
      %p78 = scmp.ne.s32.totalorder %s73, %s75
      %p79 = scmp.eq.s32.totalorder %s18, 0
      %p80 = por %p78, %p79
      %p81 = scmp.ne.s32.totalorder %s73, %s75
      %p82 = scmp.eq.s32.totalorder %s23, 1
      %p83 = por %p81, %p82
      %p84 = scmp.ne.s32.totalorder %s75, %s76
      %p85 = scmp.eq.s32.totalorder %s23, 0
      %p86 = por %p84, %p85
      %p87 = scmp.ne.s32.totalorder %s75, %s76
      %p88 = scmp.eq.s32.totalorder %s24, 1
      %p89 = por %p87, %p88
      %p91 = scmp.ne.s32.totalorder %s76, %s90
      %p92 = scmp.eq.s32.totalorder %s24, 0
      %p93 = por %p91, %p92
      %s95 = sadd.s32 %s94, 1
      %p98 = scmp.eq.s32.totalorder %s18, 1
      %p99 = scmp.ne.s32.totalorder %s94, %s96
      %p100 = scmp.eq.s32.totalorder %s18, 0
      %p101 = por %p99, %p100
      %p102 = scmp.ne.s32.totalorder %s94, %s96
      %p103 = scmp.eq.s32.totalorder %s23, 1
      %p104 = por %p102, %p103
      %p105 = scmp.ne.s32.totalorder %s96, %s97
      %p106 = scmp.eq.s32.totalorder %s23, 0
      %p107 = por %p105, %p106
      %p108 = scmp.ne.s32.totalorder %s96, %s97
      %p109 = scmp.eq.s32.totalorder %s24, 1
      %p110 = por %p108, %p109
      %p112 = scmp.ne.s32.totalorder %s97, %s111
      %p113 = scmp.eq.s32.totalorder %s24, 0
      %p114 = por %p112, %p113
      %s116 = sadd.s32 %s115, 1
      %p119 = scmp.eq.s32.totalorder %s18, 1
      %p120 = scmp.ne.s32.totalorder %s115, %s117
      %p121 = scmp.eq.s32.totalorder %s18, 0
      %p122 = por %p120, %p121
      %p123 = scmp.ne.s32.totalorder %s115, %s117
      %p124 = scmp.eq.s32.totalorder %s23, 1
      %p125 = por %p123, %p124
      %p126 = scmp.ne.s32.totalorder %s117, %s118
      %p127 = scmp.eq.s32.totalorder %s23, 0
      %p128 = por %p126, %p127
      %p129 = scmp.ne.s32.totalorder %s117, %s118
      %p130 = scmp.eq.s32.totalorder %s24, 1
      %p131 = por %p129, %p130
      %p133 = scmp.ne.s32.totalorder %s118, %s132
      %p134 = scmp.eq.s32.totalorder %s24, 0
      %p135 = por %p133, %p134
      %s136 = ssub.s32 %s18, %s25
      %p137 = scmp.eq.s32.totalorder %s136, 0
      %s139 = sadd.s32 %s138, 1
      %s140 = scalar_select %p137, %s138, %s139
      %p143 = pneg %p137
      %p144 = scmp.eq.s32.totalorder %s18, 1
      %p145 = por %p143, %p144
      %p146 = scmp.ne.s32.totalorder %s138, %s141
      %p147 = scmp.eq.s32.totalorder %s18, 0
      %p148 = por %p146, %p147
      %p149 = scmp.ne.s32.totalorder %s138, %s141
      %p150 = scmp.eq.s32.totalorder %s23, 1
      %p151 = por %p149, %p150
      %p152 = scmp.ne.s32.totalorder %s141, %s142
      %p153 = scmp.eq.s32.totalorder %s23, 0
      %p154 = por %p152, %p153
      %p155 = scmp.ne.s32.totalorder %s141, %s142
      %p156 = scmp.eq.s32.totalorder %s24, 1
      %p157 = por %p155, %p156
      %p159 = scmp.ne.s32.totalorder %s142, %s158
      %p160 = scmp.eq.s32.totalorder %s24, 0
      %p161 = por %p159, %p160
      %p162 = scmp.le.s32.totalorder 1, %s18
      %p163 = scmp.lt.s32.totalorder %s18, 3
      %p164 = pnand %p162, %p163
      %p165 = pneg %p164
      // Predicated region
      $region9: #{tpu_custom_call.1} parent=5 // pred_check
        _
      $region10: #{tpu_custom_call.1} parent=5 // pred_check_branch
        %167 = sbr.rel (%p164) target = $region12
      $region11: #{tpu_custom_call.1} parent=5 // pred_region
        %s168 = ssub.s32 %s18, 1
        // Predicated region
        $region13: #{tpu_custom_call.1} parent=11 // pred_check
          %p169 = pneg %p65
        $region14: #{tpu_custom_call.1} parent=11 // pred_check_branch
          %171 = sbr.rel (%p169) target = $region16
        $region15: #{tpu_custom_call.1} parent=11 // pred_region
          %s173 = ssub.s32 1024, 1024
          %174 = vsyncadd [#allocation6], %s173
          %s175 = sshll.u32 [#allocation5], 4
          %s176 = int_to_ptr.vmem [resolvable:$true] %s175
          %181 = dma.hbm_to_vmem [thread:$0]  %s1, 1024, %s176, [#allocation6], 64, 64, 4
        $region16: #{tpu_custom_call.1} parent=11 // pred_fallthru
          _
        // Predicated region
        $region17: #{tpu_custom_call.1} parent=11 // pred_check
          %p182 = pneg %p86
        $region18: #{tpu_custom_call.1} parent=11 // pred_check_branch
          %184 = sbr.rel (%p182) target = $region20
        $region19: #{tpu_custom_call.1} parent=11 // pred_region
          _
        $region20: #{tpu_custom_call.1} parent=11 // pred_fallthru
          _
        // Predicated region
        $region21: #{tpu_custom_call.1} parent=11 // pred_check
          %p185 = pneg %p107
        $region22: #{tpu_custom_call.1} parent=11 // pred_check_branch
          %187 = sbr.rel (%p185) target = $region24
        $region23: #{tpu_custom_call.1} parent=11 // pred_region
          %s189 = ssub.s32 1024, 1024
          %190 = vsyncadd [#allocation6], %s189
          %s191 = sshll.u32 [#allocation7], 4
          %s192 = int_to_ptr.vmem [resolvable:$true] %s191
          %197 = dma.hbm_to_vmem [thread:$0]  %s3, 1024, %s192, [#allocation6], 64, 64, 4
        $region24: #{tpu_custom_call.1} parent=11 // pred_fallthru
          _
        // Predicated region
        $region25: #{tpu_custom_call.1} parent=11 // pred_check
          %p198 = pneg %p128
        $region26: #{tpu_custom_call.1} parent=11 // pred_check_branch
          %200 = sbr.rel (%p198) target = $region28
        $region27: #{tpu_custom_call.1} parent=11 // pred_region
          _
        $region28: #{tpu_custom_call.1} parent=11 // pred_fallthru
          _
      $region12: #{tpu_custom_call.1} parent=5 // pred_fallthru
        _
      %p201 = scmp.lt.s32.totalorder %s18, 2
      // Predicated region
      $region29: #{tpu_custom_call.1} parent=5 // pred_check
        %p202 = pneg %p201
      $region30: #{tpu_custom_call.1} parent=5 // pred_check_branch
        %204 = sbr.rel (%p202) target = $region32
      $region31: #{tpu_custom_call.1} parent=5 // pred_region
        // Predicated region
        $region33: #{tpu_custom_call.1} parent=31 // pred_check
          %p205 = pneg %p38
        $region34: #{tpu_custom_call.1} parent=31 // pred_check_branch
          %207 = sbr.rel (%p205) target = $region36
        $region35: #{tpu_custom_call.1} parent=31 // pred_region
          %s208 = sand.u32 %s28, 1
          %s209 = scalar_lea.sflag [#allocation3], %s208
          %s210 = sand.u32 %s28, 1
          %s211 = smul.addr %s210, 4
          %s212 = scalar_lea.vmem [#allocation2], %s211
          %s214 = ssub.s32 64, 64
          %215 = vsyncadd %s209, %s214
          %s216 = smul.addr %s18, 64
          %s217 = scalar_lea.hbm %s0, %s216
          %s219 = sshll.u32 %s212, 4
          %s220 = int_to_ptr.vmem [resolvable:$true] %s219
          %222 = dma.hbm_to_vmem [thread:$0]  %s217, 64, %s220, %s209
        $region36: #{tpu_custom_call.1} parent=31 // pred_fallthru
          _
      $region32: #{tpu_custom_call.1} parent=5 // pred_fallthru
        _
      %p223 = scmp.le.s32.totalorder 1, %s18
      %p224 = scmp.lt.s32.totalorder %s18, 3
      %p225 = pnand %p223, %p224
      %p226 = pneg %p225
      // Predicated region
      $region37: #{tpu_custom_call.1} parent=5 // pred_check
        _
      $region38: #{tpu_custom_call.1} parent=5 // pred_check_branch
        %228 = sbr.rel (%p225) target = $region40
      $region39: #{tpu_custom_call.1} parent=5 // pred_region
        %s229 = ssub.s32 %s18, 1
        %s230 = sand.u32 %s31, 1
        %s231 = scalar_lea.sflag [#allocation3], %s230
        %s232 = sand.u32 %s31, 1
        %s233 = smul.addr %s232, 4
        %s234 = scalar_lea.vmem [#allocation2], %s233
        // Predicated region
        $region41: #{tpu_custom_call.1} parent=39 // pred_check
          %p235 = pneg %p44
        $region42: #{tpu_custom_call.1} parent=39 // pred_check_branch
          %237 = sbr.rel (%p235) target = $region44
        $region43: #{tpu_custom_call.1} parent=39 // pred_region
          %238 = dma.done %s231, 64
        $region44: #{tpu_custom_call.1} parent=39 // pred_fallthru
          _
        // Predicated region
        $region45: #{tpu_custom_call.1} parent=39 // pred_check
          %p239 = pneg %p65
        $region46: #{tpu_custom_call.1} parent=39 // pred_check_branch
          %241 = sbr.rel (%p239) target = $region48
        $region47: #{tpu_custom_call.1} parent=39 // pred_region
          %242 = dma.done [#allocation6], 1024
        $region48: #{tpu_custom_call.1} parent=39 // pred_fallthru
          _
        // Predicated region
        $region49: #{tpu_custom_call.1} parent=39 // pred_check
          %p243 = pneg %p107
        $region50: #{tpu_custom_call.1} parent=39 // pred_check_branch
          %245 = sbr.rel (%p243) target = $region52
        $region51: #{tpu_custom_call.1} parent=39 // pred_region
          %246 = dma.done [#allocation6], 1024
        $region52: #{tpu_custom_call.1} parent=39 // pred_fallthru
          _
        %s247 = sand.u32 %s31, 1
        %s248 = scalar_lea.sflag [#allocation3], %s247
        %s249 = sand.u32 %s31, 1
        %s250 = smul.addr %s249, 4
        %s251 = scalar_lea.vmem [#allocation2], %s250
        %p252 = pneg %p44
        %p253 = pneg %p41
        %p254 = pneg %p65
        %p255 = pneg %p62
        %p256 = pneg %p86
        %p257 = pneg %p83
        %p258 = pneg %p107
        %p259 = pneg %p104
        %p260 = pneg %p128
        %p261 = pneg %p125
        %p262 = pneg %p154
        %p263 = pneg %p151
        %s264 = sand.u32 %s141, 1
        %s265 = scalar_lea.sflag [#allocation4], %s264
        %s266 = sand.u32 %s141, 1
        %s267 = smul.addr %s266, 8
        %s268 = scalar_lea.vmem [#allocation8], %s267
        %v270 = vld [vmem:[%s234] sm:$0xf]
        %v271 = vld [vmem:[#allocation5] sm:$0xf]
        %v272 = vld [vmem:[#allocation5 + $0x4] sm:$0xf]
        %v273 = vld [vmem:[#allocation5 + $0x8] sm:$0xf]
        %v274 = vld [vmem:[#allocation5 + $0xc] sm:$0xf]
        %v275 = vld [vmem:[#allocation5 + $0x10] sm:$0xf]
        %v276 = vld [vmem:[#allocation5 + $0x14] sm:$0xf]
        %v277 = vld [vmem:[#allocation5 + $0x18] sm:$0xf]
        %v278 = vld [vmem:[#allocation5 + $0x1c] sm:$0xf]
        %v279 = vld [vmem:[#allocation5 + $0x20] sm:$0xf]
        %v280 = vld [vmem:[#allocation5 + $0x24] sm:$0xf]
        %v281 = vld [vmem:[#allocation5 + $0x28] sm:$0xf]
        %v282 = vld [vmem:[#allocation5 + $0x2c] sm:$0xf]
        %v283 = vld [vmem:[#allocation5 + $0x30] sm:$0xf]
        %v284 = vld [vmem:[#allocation5 + $0x34] sm:$0xf]
        %v285 = vld [vmem:[#allocation5 + $0x38] sm:$0xf]
        %v286 = vld [vmem:[#allocation5 + $0x3c] sm:$0xf]
        %v287 = vld [vmem:[%s2] sm:$0x1]
        %v289 = vlaneseq
        %v290 = vshrl.u32 %v289, 7
        %v291 = vsub.s32 0, %v290
        %v292 = vrot.slane %v287, %v291
        %v310 = vunpack.c.l.b16 %v271
        %v311 = vunpack.c.l.b16 %v272
        %v312 = vunpack.c.l.b16 %v273
        %v313 = vunpack.c.l.b16 %v274
        %v314 = vunpack.c.l.b16 %v275
        %v315 = vunpack.c.l.b16 %v276
        %v316 = vunpack.c.l.b16 %v277
        %v317 = vunpack.c.l.b16 %v278
        %v318 = vunpack.c.l.b16 %v279
        %v319 = vunpack.c.l.b16 %v280
        %v320 = vunpack.c.l.b16 %v281
        %v321 = vunpack.c.l.b16 %v282
        %v322 = vunpack.c.l.b16 %v283
        %v323 = vunpack.c.l.b16 %v284
        %v324 = vunpack.c.l.b16 %v285
        %v325 = vunpack.c.l.b16 %v286
        %v326 = vpack.c.b16 %v311, %v310
        %v327 = vpack.c.b16 %v313, %v312
        %v328 = vpack.c.b16 %v315, %v314
        %v329 = vpack.c.b16 %v317, %v316
        %v330 = vpack.c.b16 %v319, %v318
        %v331 = vpack.c.b16 %v321, %v320
        %v332 = vpack.c.b16 %v323, %v322
        %v333 = vpack.c.b16 %v325, %v324
        %342 = vmatprep.subr.bf16.mxu0 0
        %343 = vmatpush1.bf16.msra.mxu0 %v326
        %344 = vmatprep.subr.bf16.mxu0 0
        %345 = vmatpush1.bf16.msra.mxu0 %v327
        %346 = vmatprep.subr.bf16.mxu0 0
        %347 = vmatpush1.bf16.msra.mxu0 %v328
        %348 = vmatprep.subr.bf16.mxu0 0
        %349 = vmatpush1.bf16.msra.mxu0 %v329
        %350 = vmatprep.subr.bf16.mxu0 0
        %351 = vmatpush1.bf16.msra.mxu0 %v330
        %352 = vmatprep.subr.bf16.mxu0 0
        %353 = vmatpush1.bf16.msra.mxu0 %v331
        %354 = vmatprep.subr.bf16.mxu0 0
        %355 = vmatpush1.bf16.msra.mxu0 %v332
        %356 = vmatprep.subr.bf16.mxu0 0
        %357 = vmatpush1.bf16.msra.mxu0 %v333
        %358 = vmatprep.subr.bf16.mxu0 0
        %359 = vmatpush1.bf16.msra.mxu0 0
        %360 = vmatprep.subr.bf16.mxu0 0
        %361 = vmatpush1.bf16.msra.mxu0 0
        %362 = vmatprep.subr.bf16.mxu0 0
        %363 = vmatpush1.bf16.msra.mxu0 0
        %364 = vmatprep.subr.bf16.mxu0 0
        %365 = vmatpush1.bf16.msra.mxu0 0
        %366 = vmatprep.subr.bf16.mxu0 0
        %367 = vmatpush1.bf16.msra.mxu0 0
        %368 = vmatprep.subr.bf16.mxu0 0
        %369 = vmatpush1.bf16.msra.mxu0 0
        %370 = vmatprep.subr.bf16.mxu0 0
        %371 = vmatpush1.bf16.msra.mxu0 0
        %372 = vmatprep.subr.bf16.mxu0 0
        %373 = vmatpush1.bf16.msra.mxu0 0
        %374 = vmatprep.mubr.bf16.mxu0 0
        %375 = vmatmul.mubr.bf16.gmra.mrb[0].mxu0 %v270
        %v376 = vpop.f32.mrb[0].mxu0
        %v377 = vadd.f32 %v292, %v376
        %v378 = vpop.f32.mrb[0].mxu0
        %v379 = vpop.f32.mrb[0].mxu0
        %v380 = vpop.f32.mrb[0].mxu0
        %381 = vdwg.mxu0
        %v382 = vtanh.pop %v377
        %v383 = vpack.c.bf16 %v382, %v382
        %v384 = vld [vmem:[#allocation7] sm:$0xf]
        %v385 = vld [vmem:[#allocation7 + $0x4] sm:$0xf]
        %v386 = vld [vmem:[#allocation7 + $0x8] sm:$0xf]
        %v387 = vld [vmem:[#allocation7 + $0xc] sm:$0xf]
        %v388 = vld [vmem:[#allocation7 + $0x10] sm:$0xf]
        %v389 = vld [vmem:[#allocation7 + $0x14] sm:$0xf]
        %v390 = vld [vmem:[#allocation7 + $0x18] sm:$0xf]
        %v391 = vld [vmem:[#allocation7 + $0x1c] sm:$0xf]
        %v392 = vld [vmem:[#allocation7 + $0x20] sm:$0xf]
        %v393 = vld [vmem:[#allocation7 + $0x24] sm:$0xf]
        %v394 = vld [vmem:[#allocation7 + $0x28] sm:$0xf]
        %v395 = vld [vmem:[#allocation7 + $0x2c] sm:$0xf]
        %v396 = vld [vmem:[#allocation7 + $0x30] sm:$0xf]
        %v397 = vld [vmem:[#allocation7 + $0x34] sm:$0xf]
        %v398 = vld [vmem:[#allocation7 + $0x38] sm:$0xf]
        %v399 = vld [vmem:[#allocation7 + $0x3c] sm:$0xf]
        %v400 = vld [vmem:[%s4] sm:$0x1]
        %v402 = vlaneseq
        %v403 = vshrl.u32 %v402, 7
        %v404 = vsub.s32 0, %v403
        %v405 = vrot.slane %v400, %v404
        %v423 = vunpack.c.l.b16 %v384
        %v424 = vunpack.c.l.b16 %v385
        %v425 = vunpack.c.l.b16 %v386
        %v426 = vunpack.c.l.b16 %v387
        %v427 = vunpack.c.l.b16 %v388
        %v428 = vunpack.c.l.b16 %v389
        %v429 = vunpack.c.l.b16 %v390
        %v430 = vunpack.c.l.b16 %v391
        %v431 = vunpack.c.l.b16 %v392
        %v432 = vunpack.c.l.b16 %v393
        %v433 = vunpack.c.l.b16 %v394
        %v434 = vunpack.c.l.b16 %v395
        %v435 = vunpack.c.l.b16 %v396
        %v436 = vunpack.c.l.b16 %v397
        %v437 = vunpack.c.l.b16 %v398
        %v438 = vunpack.c.l.b16 %v399
        %v439 = vpack.c.b16 %v424, %v423
        %v440 = vpack.c.b16 %v426, %v425
        %v441 = vpack.c.b16 %v428, %v427
        %v442 = vpack.c.b16 %v430, %v429
        %v443 = vpack.c.b16 %v432, %v431
        %v444 = vpack.c.b16 %v434, %v433
        %v445 = vpack.c.b16 %v436, %v435
        %v446 = vpack.c.b16 %v438, %v437
        %455 = vmatprep.subr.bf16.mxu0 0
        %456 = vmatpush1.bf16.msra.mxu0 %v439
        %457 = vmatprep.subr.bf16.mxu0 0
        %458 = vmatpush1.bf16.msra.mxu0 %v440
        %459 = vmatprep.subr.bf16.mxu0 0
        %460 = vmatpush1.bf16.msra.mxu0 %v441
        %461 = vmatprep.subr.bf16.mxu0 0
        %462 = vmatpush1.bf16.msra.mxu0 %v442
        %463 = vmatprep.subr.bf16.mxu0 0
        %464 = vmatpush1.bf16.msra.mxu0 %v443
        %465 = vmatprep.subr.bf16.mxu0 0
        %466 = vmatpush1.bf16.msra.mxu0 %v444
        %467 = vmatprep.subr.bf16.mxu0 0
        %468 = vmatpush1.bf16.msra.mxu0 %v445
        %469 = vmatprep.subr.bf16.mxu0 0
        %470 = vmatpush1.bf16.msra.mxu0 %v446
        %471 = vmatprep.subr.bf16.mxu0 0
        %472 = vmatpush1.bf16.msra.mxu0 0
        %473 = vmatprep.subr.bf16.mxu0 0
        %474 = vmatpush1.bf16.msra.mxu0 0
        %475 = vmatprep.subr.bf16.mxu0 0
        %476 = vmatpush1.bf16.msra.mxu0 0
        %477 = vmatprep.subr.bf16.mxu0 0
        %478 = vmatpush1.bf16.msra.mxu0 0
        %479 = vmatprep.subr.bf16.mxu0 0
        %480 = vmatpush1.bf16.msra.mxu0 0
        %481 = vmatprep.subr.bf16.mxu0 0
        %482 = vmatpush1.bf16.msra.mxu0 0
        %483 = vmatprep.subr.bf16.mxu0 0
        %484 = vmatpush1.bf16.msra.mxu0 0
        %485 = vmatprep.subr.bf16.mxu0 0
        %486 = vmatpush1.bf16.msra.mxu0 0
        %487 = vmatprep.mubr.bf16.mxu0 0
        %488 = vmatmul.mubr.bf16.gmra.mrb[0].mxu0 %v383
        %v489 = vpop.f32.mrb[0].mxu0
        %v490 = vadd.f32 %v405, %v489
        %v491 = vpop.f32.mrb[0].mxu0
        %v492 = vpop.f32.mrb[0].mxu0
        %v493 = vpop.f32.mrb[0].mxu0
        %494 = vdwg.mxu0
        %495 = vst [vmem:[%s268] sm:$0xff] %v490
        %s496 = sand.u32 %s141, 1
        %s497 = scalar_lea.sflag [#allocation4], %s496
        %s498 = sand.u32 %s141, 1
        %s499 = smul.addr %s498, 8
        %s500 = scalar_lea.vmem [#allocation8], %s499
        // Predicated region
        $region53: #{tpu_custom_call.1} parent=39 // pred_check
          %p501 = pneg %p151
        $region54: #{tpu_custom_call.1} parent=39 // pred_check_branch
          %503 = sbr.rel (%p501) target = $region56
        $region55: #{tpu_custom_call.1} parent=39 // pred_region
          %s505 = ssub.s32 128, 128
          %506 = vsyncadd %s497, %s505
          %s507 = smul.addr %s23, 128
          %s508 = scalar_lea.hbm %s5, %s507
          %s510 = sshll.u32 %s500, 4
          %s511 = int_to_ptr.vmem [resolvable:$true] %s510
          %513 = dma.vmem_to_hbm [thread:$0]  %s511, 128, %s508, %s497
        $region56: #{tpu_custom_call.1} parent=39 // pred_fallthru
          _
      $region40: #{tpu_custom_call.1} parent=5 // pred_fallthru
        _
      %p514 = scmp.le.s32.totalorder 2, %s18
      // Predicated region
      $region57: #{tpu_custom_call.1} parent=5 // pred_check
        %p515 = pneg %p514
      $region58: #{tpu_custom_call.1} parent=5 // pred_check_branch
        %517 = sbr.rel (%p515) target = $region60
      $region59: #{tpu_custom_call.1} parent=5 // pred_region
        %s518 = ssub.s32 %s18, 2
        // Predicated region
        $region61: #{tpu_custom_call.1} parent=59 // pred_check
          %p519 = pneg %p157
        $region62: #{tpu_custom_call.1} parent=59 // pred_check_branch
          %521 = sbr.rel (%p519) target = $region64
        $region63: #{tpu_custom_call.1} parent=59 // pred_region
          %s522 = sand.u32 %s142, 1
          %s523 = scalar_lea.sflag [#allocation4], %s522
          %s524 = sand.u32 %s142, 1
          %s525 = smul.addr %s524, 8
          %s526 = scalar_lea.vmem [#allocation8], %s525
          %527 = dma.done %s523, 128
        $region64: #{tpu_custom_call.1} parent=59 // pred_fallthru
          _
      $region60: #{tpu_custom_call.1} parent=5 // pred_fallthru
        _
    $region6: #{tpu_custom_call.1} parent=1 // loop_footer
      %s22 = sadd.s32 1, %s18
    $region7: #{tpu_custom_call.1} parent=1 // loop_footer_branch
      %17 = sbr.rel target = $region3
    $region8: #{tpu_custom_call.1} parent=1 // loop_exit
      _
    %528 = vsyncpa [#allocation3], 1
    %s529 = scalar_lea.sflag [#allocation3], 1
    %530 = vsyncpa %s529, 1
    %531 = vsyncpa [#allocation6], 1
    %532 = vsyncpa [#allocation4], 1
    %s533 = scalar_lea.sflag [#allocation4], 1
    %534 = vsyncpa %s533, 1

</llo_original>
